<compile_context>
chip_gen: v5e
topology: v5e:2x2
jax: 0.10.0
libtpu: 0.0.40
codegen_flags: <defaults>
</compile_context>

<pallas_src>
import functools

import jax
import jax.numpy as jnp
from jax.experimental import pallas as pl
from jax.experimental.pallas import tpu as pltpu

# ---------------- synthetic config (small shapes) ----------------
BATCH = 2
DOC_LEN = 8
MAX_SEQ_LEN = 8
SEQ_LEN = MAX_SEQ_LEN                     # requires MAX_SEQ_LEN >= SEQ_LEN - w + 1
BERT_HIDDEN_PER_LAYER = 16
BERT_N_LAYERS = 2
BERT_HIDDEN = BERT_HIDDEN_PER_LAYER * BERT_N_LAYERS      # 32
WINDOWS = (2, 3)                                          # config.windows_size
OUT_CHANNELS = 4                                          # config.out_channels
VOCAB = 50
LSTM_EMB = len(WINDOWS) * MAX_SEQ_LEN                     # lstm_embedding_size = 16

LANE = 128   # tap matrix is zero-padded to this many lanes (one MXU column group)


def _pick_tile_n(n_rows, s, h, in_bytes, vmem_budget_bytes):
    """Rows per grid step: double-buffered input block must fit the VMEM budget."""
    per_row = max(1, s * h * in_bytes)
    tile = max(1, vmem_budget_bytes // (2 * per_row))       # double-buffered input
    tile = min(tile, max(8, -(-n_rows // 2)))               # keep >= 2 grid steps (v7x: 2 TCs)
    if tile > 8:
        tile -= tile % 8                                    # sublane-friendly row count
    return int(max(1, min(tile, n_rows)))


def _vmem_limit_bytes(tile_n, s, h, n_windows, msl_pad, in_bytes):
    in_block = tile_n * s * h * in_bytes
    w_block = h * LANE * in_bytes
    out_block = tile_n * n_windows * msl_pad * 4
    taps_tmp = tile_n * s * LANE * 4
    need = 2 * (in_block + out_block) + w_block + taps_tmp   # double-buffered I/O + temps
    return int(min(max(2 * need, 32 << 20), 112 << 20))      # headroom, clamp below chip VMEM


def _cnn_silu_kernel(windows, seq_len, msl_pad, tile_n,
                     emb_ref, w_ref, b_ref, out_ref):
    """One grid step = `tile_n` (document, sentence) rows.

    emb_ref: (tile_n*S, H)                 bf16 VMEM (rows flattened in the wrapper)
    w_ref:   (H, LANE)                     bf16 VMEM; lane (off_i + dw) = channel-mean
                                                tap vector of window i, offset dw
    b_ref:   (n_windows,)                  f32  SMEM (channel-mean conv bias)
    out_ref: (tile_n, n_windows, msl_pad)  f32  VMEM
    """
    # One MXU matmul computes every (row, position) x tap dot product, f32 acc.
    taps = jnp.dot(emb_ref[...], w_ref[...],
                   preferred_element_type=jnp.float32)        # (tile_n*S, LANE) f32
    taps = taps.reshape(tile_n, seq_len, LANE)                # layout-preserving split

    rows = []
    tap_base = 0
    for i, w in enumerate(windows):
        L = seq_len - w + 1
        acc = None
        for dw in range(w):
            part = taps[:, dw:dw + L, tap_base + dw]          # (tile_n, L) shifted tap
            acc = part if acc is None else acc + part
        tap_base += w

        vals = acc + b_ref[i]                                 # folded channel-mean bias
        vals = vals * jax.nn.sigmoid(vals)                    # SiLU (f32 epilogue, v5e-safe)
        if L < msl_pad:                                       # torch zero-pad; SiLU(0)==0
            vals = jnp.concatenate(
                [vals, jnp.zeros((tile_n, msl_pad - L), jnp.float32)], axis=1)
        rows.append(vals)

    # Single lane-dense, unmasked store of the whole output block.
    out_ref[...] = jnp.stack(rows, axis=1)


def bert_embedding_cnn(embeddings, conv_ws, conv_bs, *,
                       vmem_budget_bytes=48 * 1024 * 1024):
    """embeddings: (N, S, H) f32; conv_ws[i]: (w_i*H, C); conv_bs[i]: (1, C)."""
    N, S, H = embeddings.shape
    n_win = len(WINDOWS)
    n_taps = sum(WINDOWS)
    assert n_taps <= LANE
    for w in WINDOWS:
        assert MAX_SEQ_LEN >= S - w + 1, "window output overflows its MAX_SEQ_LEN slot"

    msl_pad = -(-MAX_SEQ_LEN // LANE) * LANE                  # lane-dense output width

    # Fold the channel mean into the conv parameters (exact: mean after affine
    # is affine):  mean_C(x @ W + b) == x @ mean_C(W) + mean_C(b).
    w_taps = jnp.concatenate(
        [wf.mean(axis=1).reshape(w, H) for wf, w in zip(conv_ws, WINDOWS)], axis=0)
    w_rhs = jnp.zeros((H, LANE), jnp.float32).at[:, :n_taps].set(w_taps.T)
    w_rhs = w_rhs.astype(jnp.bfloat16)                                        # (H, 128)
    b_eff = jnp.stack([b.mean() for b in conv_bs]).astype(jnp.float32)        # (n_win,)

    in_bytes = 2                                               # bf16 embeddings
    tile_n = _pick_tile_n(N, S, H, in_bytes, vmem_budget_bytes)

    n_tiles = pl.cdiv(N, tile_n)
    n_pad = n_tiles * tile_n
    if n_pad != N:
        embeddings = jnp.pad(embeddings, ((0, n_pad - N), (0, 0), (0, 0)))
    emb_flat = embeddings.reshape(n_pad * S, H).astype(jnp.bfloat16)          # (N*S, H) bf16

    vmem_limit = _vmem_limit_bytes(tile_n, S, H, n_win, msl_pad, in_bytes)

    kernel = functools.partial(_cnn_silu_kernel, WINDOWS, S, msl_pad, tile_n)
    out3 = pl.pallas_call(
        kernel,
        out_shape=jax.ShapeDtypeStruct((n_pad, n_win, msl_pad), jnp.float32),
        grid_spec=pltpu.PrefetchScalarGridSpec(
            num_scalar_prefetch=0,
            grid=(n_tiles,),
            in_specs=[
                pl.BlockSpec((tile_n * S, H), lambda n: (n, 0)),
                pl.BlockSpec((H, LANE), lambda n: (0, 0)),
                pl.BlockSpec(memory_space=pltpu.MemorySpace.SMEM),
            ],
            out_specs=pl.BlockSpec((tile_n, n_win, msl_pad), lambda n: (n, 0, 0)),
        ),
        compiler_params=pltpu.CompilerParams(
            dimension_semantics=("parallel",),
            vmem_limit_bytes=vmem_limit,
        ),
    )(emb_flat, w_rhs, b_eff)

    # Drop the lane padding, restore torch's window-major concat layout and the
    # row padding (padded rows give SiLU(bias) != 0, so this slice matters).
    out = out3[:, :, :MAX_SEQ_LEN].reshape(n_pad, n_win * MAX_SEQ_LEN)
    return out[:N]


def reference(embeddings, conv_ws, conv_bs):
    """Unfolded f32 reference: conv (C channels) + bias, mean over C, pad, concat, SiLU."""
    outs = []
    for (wf, b), w in zip(zip(conv_ws, conv_bs), WINDOWS):
        L = SEQ_LEN - w + 1
        x_win = jnp.concatenate([embeddings[:, dw:dw + L, :] for dw in range(w)], axis=-1)
        scores = jnp.einsum("nlk,kc->nlc", x_win, wf) + b
        m = scores.mean(-1)
        m = jnp.pad(m, ((0, 0), (0, MAX_SEQ_LEN - L)))
        outs.append(m)
    full = jnp.concatenate(outs, axis=-1)
    return full * jax.nn.sigmoid(full)


if __name__ == "__main__":
    key = jax.random.PRNGKey(0)
    k_tok, k_tab, k_w, k_b = jax.random.split(key, 4)

    # Module inputs (same shapes as the torch forward).
    x = jax.random.randint(k_tok, (BATCH, DOC_LEN, SEQ_LEN), 0, VOCAB)          # token ids
    attention_mask = jnp.ones((BATCH, DOC_LEN, SEQ_LEN), jnp.int32)
    document_mask = jnp.array([[1] * DOC_LEN, [1] * 5 + [0] * (DOC_LEN - 5)], jnp.int32)

    # TODO(synk): real pretrained BERT encoder not replicated; stand-in below
    # produces deterministic per-layer hidden states via embedding-table lookup
    # and concatenates the last `bert_n_layers` of them, matching shapes.
    tables = 0.1 * jax.random.normal(
        k_tab, (BERT_N_LAYERS, VOCAB, BERT_HIDDEN_PER_LAYER), jnp.float32)
    x_flat = x.reshape(BATCH * DOC_LEN, SEQ_LEN)
    hidden_states = [tables[l][x_flat] for l in range(BERT_N_LAYERS)]
    embeddings = jnp.concatenate(hidden_states, axis=-1)                        # (N, S, H)

    # Deterministic Conv2d parameters (out_channels, 1, w, H) -> (w*H, C), (1, C).
    conv_ws, conv_bs = [], []
    for i, w in enumerate(WINDOWS):
        kw = jax.random.normal(jax.random.fold_in(k_w, i),
                               (OUT_CHANNELS, 1, w, BERT_HIDDEN), jnp.float32)
        kw = kw / jnp.sqrt(float(w * BERT_HIDDEN))
        kb = 0.01 * jax.random.normal(jax.random.fold_in(k_b, i),
                                      (OUT_CHANNELS,), jnp.float32)
        conv_ws.append(kw.reshape(OUT_CHANNELS, w * BERT_HIDDEN).T)
        conv_bs.append(kb.reshape(1, OUT_CHANNELS))

    out_flat = bert_embedding_cnn(embeddings, conv_ws, conv_bs)
    out_flat = jax.block_until_ready(out_flat)

    lstm_inputs = out_flat.reshape(BATCH, DOC_LEN, LSTM_EMB)
    lens = document_mask.sum(axis=1)
    # TODO(synk): torch pack_padded_sequence has no JAX/Pallas equivalent;
    # the padded tensor `lstm_inputs` plus `lens` carry the same information.

    ref = reference(embeddings, conv_ws, conv_bs)
    # bf16 kernel inputs (f32 accumulation) vs f32 reference -> loosened tolerance.
    assert jnp.allclose(out_flat, ref, atol=1e-2, rtol=1e-2), "mismatch vs reference"
    assert lstm_inputs.shape == (BATCH, DOC_LEN, LSTM_EMB)

    print("KERNEL_OK")
</pallas_src>

<mosaic_0001>
module attributes {stable_mosaic.version = 11 : i64} {
  func.func @_cnn_silu_kernel(%arg0: i32, %arg1: memref<64x32xbf16, #tpu.memory_space<vmem>>, %arg2: memref<32x128xbf16, #tpu.memory_space<vmem>>, %arg3: memref<2xf32, #tpu.memory_space<smem>>, %arg4: memref<8x2x128xf32, #tpu.memory_space<vmem>>) attributes {dimension_semantics = [#tpu.dimension_semantics<parallel>], iteration_bounds = array<i64: 2>, scalar_prefetch = 0 : i64, scratch_operands = 0 : i64, tpu.core_type = #tpu.core_type<tc>, window_params = [{transform_indices = @transform_0, window_bounds = array<i64: 64, 32>}, {pipeline_mode = #tpu.pipeline_mode<synchronous>, transform_indices = @transform_1, window_bounds = array<i64: 32, 128>}, {transform_indices = @transform_2, window_bounds = array<i64: 2>}, {transform_indices = @transform_3, window_bounds = array<i64: 8, 2, 128>}]} {
    %c0 = arith.constant 0 : index
    %c0_0 = arith.constant 0 : index
    %0 = vector.load %arg1[%c0, %c0_0] : memref<64x32xbf16, #tpu.memory_space<vmem>>, vector<64x32xbf16>
    %c0_1 = arith.constant 0 : index
    %c0_2 = arith.constant 0 : index
    %1 = vector.load %arg2[%c0_1, %c0_2] : memref<32x128xbf16, #tpu.memory_space<vmem>>, vector<32x128xbf16>
    %cst = arith.constant dense<0.000000e+00> : vector<64x128xf32>
    %2 = tpu.matmul %0, %1, %cst {dimension_numbers = #tpu.dot_dimension_numbers<[1], [0], [0], [1], [0, 0, 1, 1], [], []>} : vector<64x32xbf16>, vector<32x128xbf16>, vector<64x128xf32> -> vector<64x128xf32>
    %3 = vector.shape_cast %2 : vector<64x128xf32> to vector<8x8x128xf32>
    %4 = vector.extract_strided_slice %3 {offsets = [0, 0, 0], sizes = [8, 7, 1], strides = [1, 1, 1]} : vector<8x8x128xf32> to vector<8x7x1xf32>
    %5 = vector.shape_cast %4 : vector<8x7x1xf32> to vector<8x7xf32>
    %6 = vector.extract_strided_slice %3 {offsets = [0, 1, 1], sizes = [8, 7, 1], strides = [1, 1, 1]} : vector<8x8x128xf32> to vector<8x7x1xf32>
    %7 = vector.shape_cast %6 : vector<8x7x1xf32> to vector<8x7xf32>
    %8 = arith.addf %5, %7 : vector<8x7xf32>
    %c0_3 = arith.constant 0 : index
    %9 = memref.load %arg3[%c0_3] : memref<2xf32, #tpu.memory_space<smem>>
    %10 = vector.broadcast %9 : f32 to vector<8x7xf32>
    %11 = arith.addf %8, %10 : vector<8x7xf32>
    %12 = arith.negf %11 : vector<8x7xf32>
    %13 = math.exp %12 : vector<8x7xf32>
    %cst_4 = arith.constant 1.000000e+00 : f32
    %14 = vector.broadcast %cst_4 : f32 to vector<8x7xf32>
    %15 = arith.addf %14, %13 : vector<8x7xf32>
    %16 = arith.divf %14, %15 : vector<8x7xf32>
    %17 = arith.mulf %11, %16 : vector<8x7xf32>
    %cst_5 = arith.constant 0.000000e+00 : f32
    %18 = vector.broadcast %cst_5 : f32 to vector<8x121xf32>
    %19 = tpu.concatenate %17, %18 in 1 : vector<8x7xf32>, vector<8x121xf32> -> vector<8x128xf32>
    %20 = vector.extract_strided_slice %3 {offsets = [0, 0, 2], sizes = [8, 6, 1], strides = [1, 1, 1]} : vector<8x8x128xf32> to vector<8x6x1xf32>
    %21 = vector.shape_cast %20 : vector<8x6x1xf32> to vector<8x6xf32>
    %22 = vector.extract_strided_slice %3 {offsets = [0, 1, 3], sizes = [8, 6, 1], strides = [1, 1, 1]} : vector<8x8x128xf32> to vector<8x6x1xf32>
    %23 = vector.shape_cast %22 : vector<8x6x1xf32> to vector<8x6xf32>
    %24 = arith.addf %21, %23 : vector<8x6xf32>
    %25 = vector.extract_strided_slice %3 {offsets = [0, 2, 4], sizes = [8, 6, 1], strides = [1, 1, 1]} : vector<8x8x128xf32> to vector<8x6x1xf32>
    %26 = vector.shape_cast %25 : vector<8x6x1xf32> to vector<8x6xf32>
    %27 = arith.addf %24, %26 : vector<8x6xf32>
    %c1 = arith.constant 1 : index
    %28 = memref.load %arg3[%c1] : memref<2xf32, #tpu.memory_space<smem>>
    %29 = vector.broadcast %28 : f32 to vector<8x6xf32>
    %30 = arith.addf %27, %29 : vector<8x6xf32>
    %31 = arith.negf %30 : vector<8x6xf32>
    %32 = math.exp %31 : vector<8x6xf32>
    %cst_6 = arith.constant 1.000000e+00 : f32
    %33 = vector.broadcast %cst_6 : f32 to vector<8x6xf32>
    %34 = arith.addf %33, %32 : vector<8x6xf32>
    %35 = arith.divf %33, %34 : vector<8x6xf32>
    %36 = arith.mulf %30, %35 : vector<8x6xf32>
    %cst_7 = arith.constant 0.000000e+00 : f32
    %37 = vector.broadcast %cst_7 : f32 to vector<8x122xf32>
    %38 = tpu.concatenate %36, %37 in 1 : vector<8x6xf32>, vector<8x122xf32> -> vector<8x128xf32>
    %39 = vector.shape_cast %19 : vector<8x128xf32> to vector<8x1x128xf32>
    %40 = vector.shape_cast %38 : vector<8x128xf32> to vector<8x1x128xf32>
    %41 = tpu.concatenate %39, %40 in 1 : vector<8x1x128xf32>, vector<8x1x128xf32> -> vector<8x2x128xf32>
    %c0_8 = arith.constant 0 : index
    %c0_9 = arith.constant 0 : index
    %c0_10 = arith.constant 0 : index
    %42 = vector.load %arg4[%c0_8, %c0_9, %c0_10] : memref<8x2x128xf32, #tpu.memory_space<vmem>>, vector<8x2x128xf32>
    tpu.vector_store %arg4[%c0_8, %c0_9, %c0_10], %41 {strides = array<i32>} : memref<8x2x128xf32, #tpu.memory_space<vmem>>, vector<8x2x128xf32>,
    return
  }
  func.func @transform_0(%arg0: i32) -> (i32, i32) {
    %c0_i32 = arith.constant 0 : i32
    %c0_i32_0 = arith.constant 0 : i32
    return %arg0, %c0_i32 : i32, i32
  }
  func.func @transform_1(%arg0: i32) -> (i32, i32) {
    %c0_i32 = arith.constant 0 : i32
    %c0_i32_0 = arith.constant 0 : i32
    %c0_i32_1 = arith.constant 0 : i32
    return %c0_i32, %c0_i32_0 : i32, i32
  }
  func.func @transform_2(%arg0: i32) -> i32 {
    %c0_i32 = arith.constant 0 : i32
    %c0_i32_0 = arith.constant 0 : i32
    return %c0_i32 : i32
  }
  func.func @transform_3(%arg0: i32) -> (i32, i32, i32) {
    %c0_i32 = arith.constant 0 : i32
    %c0_i32_0 = arith.constant 0 : i32
    %c0_i32_1 = arith.constant 0 : i32
    return %arg0, %c0_i32, %c0_i32_0 : i32, i32, i32
  }
}

</mosaic_0001>

<llo_original>
// kernel: tpu_custom_call.1
$region0: #{tpu_custom_call.1}
  #allocation0 [shape = 'u32[]', space=smem, size = 0x4, offset = 0x4, fixed_abs, tag = 'smem constant byte address 0x4 - core index']
  #allocation1 [shape = 'u32[72,128]{1,0:T(1,128)}', space=vmem, size = 0x9000, scoped, tag = 'internal scratch']
  %s0 = inlined_call_operand.vmem [shape: bf16[128,32], index: 0, kind: input, shape index: {}]
  %s1 = inlined_call_operand.vmem [shape: bf16[32,128], index: 1, kind: input, shape index: {}]
  %s2 = inlined_call_operand.vmem [shape: f32[2], index: 2, kind: input, shape index: {}]
  %s3 = inlined_call_operand.hbm [shape: f32[16,2,128], index: 3, kind: output, shape index: {}]
  %s4 = sld [smem:[#allocation0]]
  $region49: #{tpu_custom_call.1} parent=0
    _
  %s6 = ssub.s32 1, %s4
  %s7 = scalar_select 0, %s6, %s4
  $region1: #{tpu_custom_call.1} parent=0
    #allocation2 [shape = 'u8[512]{0}', space=smem, size = 0x200, scoped, tag = 'input window, operand 2, single buffered']
    #allocation3 [shape = 's32[2]{0}', space=sflag, size = 0x8, scoped, tag = 'scoped memory for tpu_custom_call.1']
    #allocation4 [shape = 's32[2]{0}', space=sflag, size = 0x8, scoped, tag = 'scoped memory for tpu_custom_call.1']
    #allocation5 [shape = 'u8[16384]{0}', space=vmem, size = 0x4000, scoped, tag = 'output window, operand 0']
    %8 = vsyncpa [#allocation4], 0
    %9 = vsyncpa [#allocation3], 0
    %s10 = scalar_lea.sflag [#allocation3], 1
    %11 = vsyncpa %s10, 0
    loop: start=0, step=1, limit=4
    $region2: #{tpu_custom_call.1} parent=1 // loop_pre_header
      _
    $region3: #{tpu_custom_call.1} parent=1 // loop_header
      %s13 = sphi 0, %s17
      %p14 = scmp.ge.s32.totalorder %s13, 4
      %s23 = sphi 0, %s25
      %s26 = sphi 0, %s23
      %s27 = sphi 0, %s26
      %s43 = sphi 0, %s27
      %s47 = sphi 0, %s47
      %s49 = sphi 0, %s47
      %s50 = sphi 0, %s49
      %s64 = sphi 0, %s50
      %s68 = sphi 0, %s68
      %s70 = sphi 0, %s68
      %s71 = sphi 0, %s70
      %s85 = sphi 0, %s71
      %s91 = sphi 0, %s93
      %s94 = sphi 0, %s91
      %s95 = sphi 0, %s94
      %s111 = sphi 0, %s95
    $region4: #{tpu_custom_call.1} parent=1 // loop_header_branch
      %16 = sbr.rel (%p14) target = $region8
    $region5: #{tpu_custom_call.1} parent=1 // loop_body
      %s18 = ssub.s32 %s13, 1
      %s19 = ssub.s32 %s13, 2
      %s20 = sadd.s32 %s13, 1
      %s21 = ssub.s32 %s13, %s20
      %p22 = scmp.eq.s32.totalorder %s21, 0
      %s24 = sadd.s32 %s23, 1
      %s25 = scalar_select %p22, %s23, %s24
      %p28 = pneg %p22
      %p29 = scmp.eq.s32.totalorder %s13, 1
      %p30 = por %p28, %p29
      %p31 = scmp.ne.s32.totalorder %s23, %s26
      %p32 = scmp.eq.s32.totalorder %s13, 0
      %p33 = por %p31, %p32
      %p34 = scmp.ne.s32.totalorder %s23, %s26
      %p35 = scmp.eq.s32.totalorder %s18, 1
      %p36 = por %p34, %p35
      %p37 = scmp.ne.s32.totalorder %s26, %s27
      %p38 = scmp.eq.s32.totalorder %s18, 0
      %p39 = por %p37, %p38
      %p40 = scmp.ne.s32.totalorder %s26, %s27
      %p41 = scmp.eq.s32.totalorder %s19, 1
      %p42 = por %p40, %p41
      %p44 = scmp.ne.s32.totalorder %s27, %s43
      %p45 = scmp.eq.s32.totalorder %s19, 0
      %p46 = por %p44, %p45
      %s48 = sadd.s32 %s47, 1
      %p51 = scmp.eq.s32.totalorder %s13, 1
      %p52 = scmp.ne.s32.totalorder %s47, %s49
      %p53 = scmp.eq.s32.totalorder %s13, 0
      %p54 = por %p52, %p53
      %p55 = scmp.ne.s32.totalorder %s47, %s49
      %p56 = scmp.eq.s32.totalorder %s18, 1
      %p57 = por %p55, %p56
      %p58 = scmp.ne.s32.totalorder %s49, %s50
      %p59 = scmp.eq.s32.totalorder %s18, 0
      %p60 = por %p58, %p59
      %p61 = scmp.ne.s32.totalorder %s49, %s50
      %p62 = scmp.eq.s32.totalorder %s19, 1
      %p63 = por %p61, %p62
      %p65 = scmp.ne.s32.totalorder %s50, %s64
      %p66 = scmp.eq.s32.totalorder %s19, 0
      %p67 = por %p65, %p66
      %s69 = sadd.s32 %s68, 1
      %p72 = scmp.eq.s32.totalorder %s13, 1
      %p73 = scmp.ne.s32.totalorder %s68, %s70
      %p74 = scmp.eq.s32.totalorder %s13, 0
      %p75 = por %p73, %p74
      %p76 = scmp.ne.s32.totalorder %s68, %s70
      %p77 = scmp.eq.s32.totalorder %s18, 1
      %p78 = por %p76, %p77
      %p79 = scmp.ne.s32.totalorder %s70, %s71
      %p80 = scmp.eq.s32.totalorder %s18, 0
      %p81 = por %p79, %p80
      %p82 = scmp.ne.s32.totalorder %s70, %s71
      %p83 = scmp.eq.s32.totalorder %s19, 1
      %p84 = por %p82, %p83
      %p86 = scmp.ne.s32.totalorder %s71, %s85
      %p87 = scmp.eq.s32.totalorder %s19, 0
      %p88 = por %p86, %p87
      %s89 = ssub.s32 %s13, %s20
      %p90 = scmp.eq.s32.totalorder %s89, 0
      %s92 = sadd.s32 %s91, 1
      %s93 = scalar_select %p90, %s91, %s92
      %p96 = pneg %p90
      %p97 = scmp.eq.s32.totalorder %s13, 1
      %p98 = por %p96, %p97
      %p99 = scmp.ne.s32.totalorder %s91, %s94
      %p100 = scmp.eq.s32.totalorder %s13, 0
      %p101 = por %p99, %p100
      %p102 = scmp.ne.s32.totalorder %s91, %s94
      %p103 = scmp.eq.s32.totalorder %s18, 1
      %p104 = por %p102, %p103
      %p105 = scmp.ne.s32.totalorder %s94, %s95
      %p106 = scmp.eq.s32.totalorder %s18, 0
      %p107 = por %p105, %p106
      %p108 = scmp.ne.s32.totalorder %s94, %s95
      %p109 = scmp.eq.s32.totalorder %s19, 1
      %p110 = por %p108, %p109
      %p112 = scmp.ne.s32.totalorder %s95, %s111
      %p113 = scmp.eq.s32.totalorder %s19, 0
      %p114 = por %p112, %p113
      %p115 = scmp.le.s32.totalorder 1, %s13
      %p116 = scmp.lt.s32.totalorder %s13, 3
      %p117 = pnand %p115, %p116
      %p118 = pneg %p117
      // Predicated region
      $region9: #{tpu_custom_call.1} parent=5 // pred_check
        _
      $region10: #{tpu_custom_call.1} parent=5 // pred_check_branch
        %120 = sbr.rel (%p117) target = $region12
      $region11: #{tpu_custom_call.1} parent=5 // pred_region
        %s121 = ssub.s32 %s13, 1
        // Predicated region
        $region13: #{tpu_custom_call.1} parent=11 // pred_check
          %p122 = pneg %p60
        $region14: #{tpu_custom_call.1} parent=11 // pred_check_branch
          %124 = sbr.rel (%p122) target = $region16
        $region15: #{tpu_custom_call.1} parent=11 // pred_region
          _
        $region16: #{tpu_custom_call.1} parent=11 // pred_fallthru
          _
        // Predicated region
        $region17: #{tpu_custom_call.1} parent=11 // pred_check
          %p125 = pneg %p81
        $region18: #{tpu_custom_call.1} parent=11 // pred_check_branch
          %127 = sbr.rel (%p125) target = $region20
        $region19: #{tpu_custom_call.1} parent=11 // pred_region
          %129 = vsyncadd [#allocation4], 0
          %s131 = sshll.u32 %s2, 4
          %s132 = int_to_ptr.vmem [resolvable:$true] %s131
          %134 = dma.vmem_to_smem %s132, 16, [#allocation2], [#allocation4]
        $region20: #{tpu_custom_call.1} parent=11 // pred_fallthru
          _
      $region12: #{tpu_custom_call.1} parent=5 // pred_fallthru
        _
      %p135 = scmp.lt.s32.totalorder %s13, 2
      // Predicated region
      $region21: #{tpu_custom_call.1} parent=5 // pred_check
        %p136 = pneg %p135
      $region22: #{tpu_custom_call.1} parent=5 // pred_check_branch
        %138 = sbr.rel (%p136) target = $region24
      $region23: #{tpu_custom_call.1} parent=5 // pred_region
        // Predicated region
        $region25: #{tpu_custom_call.1} parent=23 // pred_check
          %p139 = pneg %p33
        $region26: #{tpu_custom_call.1} parent=23 // pred_check_branch
          %141 = sbr.rel (%p139) target = $region28
        $region27: #{tpu_custom_call.1} parent=23 // pred_region
          %s142 = smul.u32 8, %s13
          %p143 = scmp.lt.s32.totalorder %s142, 15
          %s144 = scalar_select %p143, %s142, 15
          %s145 = smul.addr %s144, 4
          %s146 = scalar_lea.vmem %s0, %s145
          %s147 = smul.u32 8, %s13
        $region28: #{tpu_custom_call.1} parent=23 // pred_fallthru
          _
      $region24: #{tpu_custom_call.1} parent=5 // pred_fallthru
        _
      %p148 = scmp.le.s32.totalorder 1, %s13
      %p149 = scmp.lt.s32.totalorder %s13, 3
      %p150 = pnand %p148, %p149
      %p151 = pneg %p150
      // Predicated region
      $region29: #{tpu_custom_call.1} parent=5 // pred_check
        _
      $region30: #{tpu_custom_call.1} parent=5 // pred_check_branch
        %153 = sbr.rel (%p150) target = $region32
      $region31: #{tpu_custom_call.1} parent=5 // pred_region
        %s154 = ssub.s32 %s13, 1
        // Predicated region
        $region33: #{tpu_custom_call.1} parent=31 // pred_check
          %p155 = pneg %p81
        $region34: #{tpu_custom_call.1} parent=31 // pred_check_branch
          %157 = sbr.rel (%p155) target = $region36
        $region35: #{tpu_custom_call.1} parent=31 // pred_region
          %159 = dma.done [#allocation4], 16
        $region36: #{tpu_custom_call.1} parent=31 // pred_fallthru
          _
        %160 = sfence
        %s161 = smul.u32 8, %s18
        %p162 = scmp.lt.s32.totalorder %s161, 15
        %s163 = scalar_select %p162, %s161, 15
        %s164 = smul.addr %s163, 4
        %s165 = scalar_lea.vmem %s0, %s164
        %p166 = pneg %p39
        %p167 = pneg %p36
        %p168 = pneg %p60
        %p169 = pneg %p57
        %p170 = pneg %p81
        %p171 = pneg %p78
        %p172 = pneg %p107
        %p173 = pneg %p104
        %s174 = sand.u32 %s94, 1
        %s175 = scalar_lea.sflag [#allocation3], %s174
        %s176 = sand.u32 %s94, 1
        %s177 = smul.addr %s176, 16
        %s178 = scalar_lea.vmem [#allocation5], %s177
        %s179 = smul.u32 8, %s18
        %p180 = scmp.lt.s32.totalorder %s179, 15
        %s181 = scalar_select %p180, %s179, 15
        %s182 = smul.addr %s181, 4
        %s183 = scalar_lea.vmem %s0, %s182
        %s184 = smul.u32 8, %s18
        %s185 = smul.u32 8, %s18
        %v187 = vld [vmem:[%s183] sm:$0xf]
        %v188 = vld [vmem:[%s183 + $0x4] sm:$0xf]
        %v189 = vld [vmem:[%s183 + $0x8] sm:$0xf]
        %v190 = vld [vmem:[%s183 + $0xc] sm:$0xf]
        %v191 = vld [vmem:[%s183 + $0x10] sm:$0xf]
        %v192 = vld [vmem:[%s183 + $0x14] sm:$0xf]
        %v193 = vld [vmem:[%s183 + $0x18] sm:$0xf]
        %v194 = vld [vmem:[%s183 + $0x1c] sm:$0xf]
        %v195 = vld [vmem:[%s1] sm:$0xf]
        %v196 = vld [vmem:[%s1 + $0x4] sm:$0xf]
        %v197 = vld [vmem:[%s1 + $0x8] sm:$0xf]
        %v198 = vld [vmem:[%s1 + $0xc] sm:$0xf]
        %v207 = vunpack.c.l.b16 %v187
        %v208 = vunpack.c.l.b16 %v188
        %v209 = vunpack.c.l.b16 %v189
        %v210 = vunpack.c.l.b16 %v190
        %v211 = vunpack.c.l.b16 %v191
        %v212 = vunpack.c.l.b16 %v192
        %v213 = vunpack.c.l.b16 %v193
        %v214 = vunpack.c.l.b16 %v194
        %v215 = vpack.c.b16 %v208, %v207
        %v216 = vpack.c.b16 %v210, %v209
        %v217 = vpack.c.b16 %v212, %v211
        %v218 = vpack.c.b16 %v214, %v213
        %v223 = vunpack.c.l.b16 %v195
        %v224 = vunpack.c.l.b16 %v196
        %v225 = vunpack.c.l.b16 %v197
        %v226 = vunpack.c.l.b16 %v198
        %v227 = vpack.c.b16 %v224, %v223
        %v228 = vpack.c.b16 %v226, %v225
        %vm231 = vcmask 261120
        %v233 = vsel %vm231, %v215, 0
        %v236 = vsel %vm231, %v216, 0
        %v239 = vsel %vm231, %v217, 0
        %v242 = vsel %vm231, %v218, 0
        %244 = vmatpush.bf16.msra.mxu0 0
        %245 = vmatpush.bf16.msra.mxu0 0
        %246 = vmatpush.bf16.msra.mxu0 0
        %247 = vmatpush.bf16.msra.mxu0 0
        %248 = vmatpush.bf16.msra.mxu0 0
        %249 = vmatpush.bf16.msra.mxu0 0
        %250 = vmatpush.bf16.msra.mxu0 %v228
        %251 = vmatpush.bf16.msra.mxu0 %v227
        %252 = vmatmul.bf16.gmra.mxu0 %v233
        %v253 = vpop.f32.mrf.mxu0
        %v254 = vadd.f32 0.0, %v253
        %v255 = vpop.f32.mrf.mxu0
        %v256 = vadd.f32 0.0, %v255
        %257 = vmatmul.bf16.gmra.mxu0 %v236
        %v258 = vpop.f32.mrf.mxu0
        %v259 = vadd.f32 0.0, %v258
        %v260 = vpop.f32.mrf.mxu0
        %v261 = vadd.f32 0.0, %v260
        %262 = vmatmul.bf16.gmra.mxu0 %v239
        %v263 = vpop.f32.mrf.mxu0
        %v264 = vadd.f32 0.0, %v263
        %v265 = vpop.f32.mrf.mxu0
        %v266 = vadd.f32 0.0, %v265
        %267 = vmatmul.bf16.gmra.mxu0 %v242
        %v268 = vpop.f32.mrf.mxu0
        %v269 = vadd.f32 0.0, %v268
        %v270 = vpop.f32.mrf.mxu0
        %v271 = vadd.f32 0.0, %v270
        %272 = vdwg.mxu0
        %v281 = vrot.slane %v254, 1
        %v282 = vrot.slane %v256, 1
        %v283 = vrot.slane %v259, 1
        %v284 = vrot.slane %v261, 1
        %v285 = vrot.slane %v264, 1
        %v286 = vrot.slane %v266, 1
        %v287 = vrot.slane %v269, 1
        %v288 = vrot.slane %v271, 1
        %289 = vrot.lane.b32.xlu0 %v281, 127
        %v290 = vpop.permute.xlu0 %289
        %291 = vrot.lane.b32.xlu0 %v282, 127
        %v292 = vpop.permute.xlu0 %291
        %293 = vrot.lane.b32.xlu0 %v283, 127
        %v294 = vpop.permute.xlu0 %293
        %295 = vrot.lane.b32.xlu0 %v284, 127
        %v296 = vpop.permute.xlu0 %295
        %297 = vrot.lane.b32.xlu0 %v285, 127
        %v298 = vpop.permute.xlu0 %297
        %299 = vrot.lane.b32.xlu0 %v286, 127
        %v300 = vpop.permute.xlu0 %299
        %301 = vrot.lane.b32.xlu0 %v287, 127
        %v302 = vpop.permute.xlu0 %301
        %303 = vrot.lane.b32.xlu0 %v288, 127
        %v304 = vpop.permute.xlu0 %303
        %v313 = vadd.f32 %v254, %v290
        %v314 = vadd.f32 %v256, %v292
        %v315 = vadd.f32 %v259, %v294
        %v316 = vadd.f32 %v261, %v296
        %v317 = vadd.f32 %v264, %v298
        %v318 = vadd.f32 %v266, %v300
        %v319 = vadd.f32 %v269, %v302
        %v320 = vadd.f32 %v271, %v304
        %s321 = sld [smem:[#allocation2]]
        %v322 = vstv %s321
        %v323 = vadd.f32 %v313, %v322
        %v324 = vadd.f32 %v314, %v322
        %v325 = vadd.f32 %v315, %v322
        %v326 = vadd.f32 %v316, %v322
        %v327 = vadd.f32 %v317, %v322
        %v328 = vadd.f32 %v318, %v322
        %v329 = vadd.f32 %v319, %v322
        %v330 = vadd.f32 %v320, %v322
        %v331 = vxor.u32 %v323, 2147483648
        %v332 = vxor.u32 %v324, 2147483648
        %v333 = vxor.u32 %v325, 2147483648
        %v334 = vxor.u32 %v326, 2147483648
        %v335 = vxor.u32 %v327, 2147483648
        %v336 = vxor.u32 %v328, 2147483648
        %v337 = vxor.u32 %v329, 2147483648
        %v338 = vxor.u32 %v330, 2147483648
        %v339 = vmul.f32 %v331, 1.442695
        %v340 = vpow.pop %v339
        %v341 = vmul.f32 %v332, 1.442695
        %v342 = vpow.pop %v341
        %v343 = vmul.f32 %v333, 1.442695
        %v344 = vpow.pop %v343
        %v345 = vmul.f32 %v334, 1.442695
        %v346 = vpow.pop %v345
        %v347 = vmul.f32 %v335, 1.442695
        %v348 = vpow.pop %v347
        %v349 = vmul.f32 %v336, 1.442695
        %v350 = vpow.pop %v349
        %v351 = vmul.f32 %v337, 1.442695
        %v352 = vpow.pop %v351
        %v353 = vmul.f32 %v338, 1.442695
        %v354 = vpow.pop %v353
        %v355 = vadd.f32 %v340, 1.0
        %v356 = vadd.f32 %v342, 1.0
        %v357 = vadd.f32 %v344, 1.0
        %v358 = vadd.f32 %v346, 1.0
        %v359 = vadd.f32 %v348, 1.0
        %v360 = vadd.f32 %v350, 1.0
        %v361 = vadd.f32 %v352, 1.0
        %v362 = vadd.f32 %v354, 1.0
        %v363 = vrcp.pop %v355
        %v364 = vmul.f32 %v355, %v363
        %v365 = vsub.f32 1.0, %v364
        %v366 = vmul.f32 %v363, %v365
        %v367 = vadd.f32 %v363, %v366
        %vm368 = vweird.f32 %v355
        %vm369 = vweird.f32 %v363
        %vm370 = vmor %vm368, %vm369
        %v371 = vsel %vm370, %v363, %v367
        %v372 = vand.u32 2147483647, %v355
        %vm373 = vcmp.eq.f32.partialorder %v372, 8.507059e+37
        %v374 = vand.u32 %v355, 2147483648
        %v375 = vor.u32 1.1754944e-38, %v374
        %v376 = vsel %vm373, %v375, %v371
        %v377 = vmul.f32 1.0, %v376
        %v378 = vrcp.pop %v356
        %v379 = vmul.f32 %v356, %v378
        %v380 = vsub.f32 1.0, %v379
        %v381 = vmul.f32 %v378, %v380
        %v382 = vadd.f32 %v378, %v381
        %vm383 = vweird.f32 %v356
        %vm384 = vweird.f32 %v378
        %vm385 = vmor %vm383, %vm384
        %v386 = vsel %vm385, %v378, %v382
        %v387 = vand.u32 2147483647, %v356
        %vm388 = vcmp.eq.f32.partialorder %v387, 8.507059e+37
        %v389 = vand.u32 %v356, 2147483648
        %v390 = vor.u32 1.1754944e-38, %v389
        %v391 = vsel %vm388, %v390, %v386
        %v392 = vmul.f32 1.0, %v391
        %v393 = vrcp.pop %v357
        %v394 = vmul.f32 %v357, %v393
        %v395 = vsub.f32 1.0, %v394
        %v396 = vmul.f32 %v393, %v395
        %v397 = vadd.f32 %v393, %v396
        %vm398 = vweird.f32 %v357
        %vm399 = vweird.f32 %v393
        %vm400 = vmor %vm398, %vm399
        %v401 = vsel %vm400, %v393, %v397
        %v402 = vand.u32 2147483647, %v357
        %vm403 = vcmp.eq.f32.partialorder %v402, 8.507059e+37
        %v404 = vand.u32 %v357, 2147483648
        %v405 = vor.u32 1.1754944e-38, %v404
        %v406 = vsel %vm403, %v405, %v401
        %v407 = vmul.f32 1.0, %v406
        %v408 = vrcp.pop %v358
        %v409 = vmul.f32 %v358, %v408
        %v410 = vsub.f32 1.0, %v409
        %v411 = vmul.f32 %v408, %v410
        %v412 = vadd.f32 %v408, %v411
        %vm413 = vweird.f32 %v358
        %vm414 = vweird.f32 %v408
        %vm415 = vmor %vm413, %vm414
        %v416 = vsel %vm415, %v408, %v412
        %v417 = vand.u32 2147483647, %v358
        %vm418 = vcmp.eq.f32.partialorder %v417, 8.507059e+37
        %v419 = vand.u32 %v358, 2147483648
        %v420 = vor.u32 1.1754944e-38, %v419
        %v421 = vsel %vm418, %v420, %v416
        %v422 = vmul.f32 1.0, %v421
        %v423 = vrcp.pop %v359
        %v424 = vmul.f32 %v359, %v423
        %v425 = vsub.f32 1.0, %v424
        %v426 = vmul.f32 %v423, %v425
        %v427 = vadd.f32 %v423, %v426
        %vm428 = vweird.f32 %v359
        %vm429 = vweird.f32 %v423
        %vm430 = vmor %vm428, %vm429
        %v431 = vsel %vm430, %v423, %v427
        %v432 = vand.u32 2147483647, %v359
        %vm433 = vcmp.eq.f32.partialorder %v432, 8.507059e+37
        %v434 = vand.u32 %v359, 2147483648
        %v435 = vor.u32 1.1754944e-38, %v434
        %v436 = vsel %vm433, %v435, %v431
        %v437 = vmul.f32 1.0, %v436
        %v438 = vrcp.pop %v360
        %v439 = vmul.f32 %v360, %v438
        %v440 = vsub.f32 1.0, %v439
        %v441 = vmul.f32 %v438, %v440
        %v442 = vadd.f32 %v438, %v441
        %vm443 = vweird.f32 %v360
        %vm444 = vweird.f32 %v438
        %vm445 = vmor %vm443, %vm444
        %v446 = vsel %vm445, %v438, %v442
        %v447 = vand.u32 2147483647, %v360
        %vm448 = vcmp.eq.f32.partialorder %v447, 8.507059e+37
        %v449 = vand.u32 %v360, 2147483648
        %v450 = vor.u32 1.1754944e-38, %v449
        %v451 = vsel %vm448, %v450, %v446
        %v452 = vmul.f32 1.0, %v451
        %v453 = vrcp.pop %v361
        %v454 = vmul.f32 %v361, %v453
        %v455 = vsub.f32 1.0, %v454
        %v456 = vmul.f32 %v453, %v455
        %v457 = vadd.f32 %v453, %v456
        %vm458 = vweird.f32 %v361
        %vm459 = vweird.f32 %v453
        %vm460 = vmor %vm458, %vm459
        %v461 = vsel %vm460, %v453, %v457
        %v462 = vand.u32 2147483647, %v361
        %vm463 = vcmp.eq.f32.partialorder %v462, 8.507059e+37
        %v464 = vand.u32 %v361, 2147483648
        %v465 = vor.u32 1.1754944e-38, %v464
        %v466 = vsel %vm463, %v465, %v461
        %v467 = vmul.f32 1.0, %v466
        %v468 = vrcp.pop %v362
        %v469 = vmul.f32 %v362, %v468
        %v470 = vsub.f32 1.0, %v469
        %v471 = vmul.f32 %v468, %v470
        %v472 = vadd.f32 %v468, %v471
        %vm473 = vweird.f32 %v362
        %vm474 = vweird.f32 %v468
        %vm475 = vmor %vm473, %vm474
        %v476 = vsel %vm475, %v468, %v472
        %v477 = vand.u32 2147483647, %v362
        %vm478 = vcmp.eq.f32.partialorder %v477, 8.507059e+37
        %v479 = vand.u32 %v362, 2147483648
        %v480 = vor.u32 1.1754944e-38, %v479
        %v481 = vsel %vm478, %v480, %v476
        %v482 = vmul.f32 1.0, %v481
        %v483 = vmul.f32 %v323, %v377
        %v484 = vmul.f32 %v324, %v392
        %v485 = vmul.f32 %v325, %v407
        %v486 = vmul.f32 %v326, %v422
        %v487 = vmul.f32 %v327, %v437
        %v488 = vmul.f32 %v328, %v452
        %v489 = vmul.f32 %v329, %v467
        %v490 = vmul.f32 %v330, %v482
        %499 = vset.pattern.permute.xlu0 0
        %500 = vperm.xlu0 %499, %v483
        %v501 = vpop.permute.xlu0 %500
        %502 = vset.pattern.permute.xlu0 0
        %503 = vperm.xlu0 %502, %v484
        %v504 = vpop.permute.xlu0 %503
        %505 = vset.pattern.permute.xlu0 0
        %506 = vperm.xlu0 %505, %v485
        %v507 = vpop.permute.xlu0 %506
        %508 = vset.pattern.permute.xlu0 0
        %509 = vperm.xlu0 %508, %v486
        %v510 = vpop.permute.xlu0 %509
        %511 = vset.pattern.permute.xlu0 0
        %512 = vperm.xlu0 %511, %v487
        %v513 = vpop.permute.xlu0 %512
        %514 = vset.pattern.permute.xlu0 0
        %515 = vperm.xlu0 %514, %v488
        %v516 = vpop.permute.xlu0 %515
        %517 = vset.pattern.permute.xlu0 0
        %518 = vperm.xlu0 %517, %v489
        %v519 = vpop.permute.xlu0 %518
        %520 = vset.pattern.permute.xlu0 0
        %521 = vperm.xlu0 %520, %v490
        %v522 = vpop.permute.xlu0 %521
        %v523 = vlaneseq
        %v524 = vand.u32 %v523, 127
        %v525 = vperm.slane %v501, %v524
        %v526 = vperm.slane %v504, %v524
        %v527 = vperm.slane %v507, %v524
        %v528 = vperm.slane %v510, %v524
        %v529 = vperm.slane %v513, %v524
        %v530 = vperm.slane %v516, %v524
        %v531 = vperm.slane %v519, %v524
        %v532 = vperm.slane %v522, %v524
        %vm533 = vcmask 1041409
        %v534 = vsel %vm533, %v526, %v525
        %vm535 = vcmask 1042434
        %v536 = vsel %vm535, %v527, %v534
        %vm537 = vcmask 1043459
        %v538 = vsel %vm537, %v528, %v536
        %vm539 = vcmask 1044484
        %v540 = vsel %vm539, %v529, %v538
        %vm541 = vcmask 1045509
        %v542 = vsel %vm541, %v530, %v540
        %vm543 = vcmask 1046534
        %v544 = vsel %vm543, %v531, %v542
        %vm545 = vcmask 1047559
        %v546 = vsel %vm545, %v532, %v544
        %vm548 = vcmask 56320
        %v549 = vsel %vm548, %v546, 0.0
        %v550 = vrot.slane %v254, 2
        %v551 = vrot.slane %v256, 2
        %v552 = vrot.slane %v259, 2
        %v553 = vrot.slane %v261, 2
        %v554 = vrot.slane %v264, 2
        %v555 = vrot.slane %v266, 2
        %v556 = vrot.slane %v269, 2
        %v557 = vrot.slane %v271, 2
        %558 = vrot.lane.b32.xlu0 %v550, 126
        %v559 = vpop.permute.xlu0 %558
        %560 = vrot.lane.b32.xlu0 %v551, 126
        %v561 = vpop.permute.xlu0 %560
        %562 = vrot.lane.b32.xlu0 %v552, 126
        %v563 = vpop.permute.xlu0 %562
        %564 = vrot.lane.b32.xlu0 %v553, 126
        %v565 = vpop.permute.xlu0 %564
        %566 = vrot.lane.b32.xlu0 %v554, 126
        %v567 = vpop.permute.xlu0 %566
        %568 = vrot.lane.b32.xlu0 %v555, 126
        %v569 = vpop.permute.xlu0 %568
        %570 = vrot.lane.b32.xlu0 %v556, 126
        %v571 = vpop.permute.xlu0 %570
        %572 = vrot.lane.b32.xlu0 %v557, 126
        %v573 = vpop.permute.xlu0 %572
        %v582 = vadd.f32 %v313, %v559
        %v583 = vadd.f32 %v314, %v561
        %v584 = vadd.f32 %v315, %v563
        %v585 = vadd.f32 %v316, %v565
        %v586 = vadd.f32 %v317, %v567
        %v587 = vadd.f32 %v318, %v569
        %v588 = vadd.f32 %v319, %v571
        %v589 = vadd.f32 %v320, %v573
        %s590 = sld [smem:[#allocation2 + $0x1]]
        %v591 = vstv %s590
        %v592 = vadd.f32 %v582, %v591
        %v593 = vadd.f32 %v583, %v591
        %v594 = vadd.f32 %v584, %v591
        %v595 = vadd.f32 %v585, %v591
        %v596 = vadd.f32 %v586, %v591
        %v597 = vadd.f32 %v587, %v591
        %v598 = vadd.f32 %v588, %v591
        %v599 = vadd.f32 %v589, %v591
        %v600 = vxor.u32 %v592, 2147483648
        %v601 = vxor.u32 %v593, 2147483648
        %v602 = vxor.u32 %v594, 2147483648
        %v603 = vxor.u32 %v595, 2147483648
        %v604 = vxor.u32 %v596, 2147483648
        %v605 = vxor.u32 %v597, 2147483648
        %v606 = vxor.u32 %v598, 2147483648
        %v607 = vxor.u32 %v599, 2147483648
        %v608 = vmul.f32 %v600, 1.442695
        %v609 = vpow.pop %v608
        %v610 = vmul.f32 %v601, 1.442695
        %v611 = vpow.pop %v610
        %v612 = vmul.f32 %v602, 1.442695
        %v613 = vpow.pop %v612
        %v614 = vmul.f32 %v603, 1.442695
        %v615 = vpow.pop %v614
        %v616 = vmul.f32 %v604, 1.442695
        %v617 = vpow.pop %v616
        %v618 = vmul.f32 %v605, 1.442695
        %v619 = vpow.pop %v618
        %v620 = vmul.f32 %v606, 1.442695
        %v621 = vpow.pop %v620
        %v622 = vmul.f32 %v607, 1.442695
        %v623 = vpow.pop %v622
        %v624 = vadd.f32 %v609, 1.0
        %v625 = vadd.f32 %v611, 1.0
        %v626 = vadd.f32 %v613, 1.0
        %v627 = vadd.f32 %v615, 1.0
        %v628 = vadd.f32 %v617, 1.0
        %v629 = vadd.f32 %v619, 1.0
        %v630 = vadd.f32 %v621, 1.0
        %v631 = vadd.f32 %v623, 1.0
        %v632 = vrcp.pop %v624
        %v633 = vmul.f32 %v624, %v632
        %v634 = vsub.f32 1.0, %v633
        %v635 = vmul.f32 %v632, %v634
        %v636 = vadd.f32 %v632, %v635
        %vm637 = vweird.f32 %v624
        %vm638 = vweird.f32 %v632
        %vm639 = vmor %vm637, %vm638
        %v640 = vsel %vm639, %v632, %v636
        %v641 = vand.u32 2147483647, %v624
        %vm642 = vcmp.eq.f32.partialorder %v641, 8.507059e+37
        %v643 = vand.u32 %v624, 2147483648
        %v644 = vor.u32 1.1754944e-38, %v643
        %v645 = vsel %vm642, %v644, %v640
        %v646 = vmul.f32 1.0, %v645
        %v647 = vrcp.pop %v625
        %v648 = vmul.f32 %v625, %v647
        %v649 = vsub.f32 1.0, %v648
        %v650 = vmul.f32 %v647, %v649
        %v651 = vadd.f32 %v647, %v650
        %vm652 = vweird.f32 %v625
        %vm653 = vweird.f32 %v647
        %vm654 = vmor %vm652, %vm653
        %v655 = vsel %vm654, %v647, %v651
        %v656 = vand.u32 2147483647, %v625
        %vm657 = vcmp.eq.f32.partialorder %v656, 8.507059e+37
        %v658 = vand.u32 %v625, 2147483648
        %v659 = vor.u32 1.1754944e-38, %v658
        %v660 = vsel %vm657, %v659, %v655
        %v661 = vmul.f32 1.0, %v660
        %v662 = vrcp.pop %v626
        %v663 = vmul.f32 %v626, %v662
        %v664 = vsub.f32 1.0, %v663
        %v665 = vmul.f32 %v662, %v664
        %v666 = vadd.f32 %v662, %v665
        %vm667 = vweird.f32 %v626
        %vm668 = vweird.f32 %v662
        %vm669 = vmor %vm667, %vm668
        %v670 = vsel %vm669, %v662, %v666
        %v671 = vand.u32 2147483647, %v626
        %vm672 = vcmp.eq.f32.partialorder %v671, 8.507059e+37
        %v673 = vand.u32 %v626, 2147483648
        %v674 = vor.u32 1.1754944e-38, %v673
        %v675 = vsel %vm672, %v674, %v670
        %v676 = vmul.f32 1.0, %v675
        %v677 = vrcp.pop %v627
        %v678 = vmul.f32 %v627, %v677
        %v679 = vsub.f32 1.0, %v678
        %v680 = vmul.f32 %v677, %v679
        %v681 = vadd.f32 %v677, %v680
        %vm682 = vweird.f32 %v627
        %vm683 = vweird.f32 %v677
        %vm684 = vmor %vm682, %vm683
        %v685 = vsel %vm684, %v677, %v681
        %v686 = vand.u32 2147483647, %v627
        %vm687 = vcmp.eq.f32.partialorder %v686, 8.507059e+37
        %v688 = vand.u32 %v627, 2147483648
        %v689 = vor.u32 1.1754944e-38, %v688
        %v690 = vsel %vm687, %v689, %v685
        %v691 = vmul.f32 1.0, %v690
        %v692 = vrcp.pop %v628
        %v693 = vmul.f32 %v628, %v692
        %v694 = vsub.f32 1.0, %v693
        %v695 = vmul.f32 %v692, %v694
        %v696 = vadd.f32 %v692, %v695
        %vm697 = vweird.f32 %v628
        %vm698 = vweird.f32 %v692
        %vm699 = vmor %vm697, %vm698
        %v700 = vsel %vm699, %v692, %v696
        %v701 = vand.u32 2147483647, %v628
        %vm702 = vcmp.eq.f32.partialorder %v701, 8.507059e+37
        %v703 = vand.u32 %v628, 2147483648
        %v704 = vor.u32 1.1754944e-38, %v703
        %v705 = vsel %vm702, %v704, %v700
        %v706 = vmul.f32 1.0, %v705
        %v707 = vrcp.pop %v629
        %v708 = vmul.f32 %v629, %v707
        %v709 = vsub.f32 1.0, %v708
        %v710 = vmul.f32 %v707, %v709
        %v711 = vadd.f32 %v707, %v710
        %vm712 = vweird.f32 %v629
        %vm713 = vweird.f32 %v707
        %vm714 = vmor %vm712, %vm713
        %v715 = vsel %vm714, %v707, %v711
        %v716 = vand.u32 2147483647, %v629
        %vm717 = vcmp.eq.f32.partialorder %v716, 8.507059e+37
        %v718 = vand.u32 %v629, 2147483648
        %v719 = vor.u32 1.1754944e-38, %v718
        %v720 = vsel %vm717, %v719, %v715
        %v721 = vmul.f32 1.0, %v720
        %v722 = vrcp.pop %v630
        %v723 = vmul.f32 %v630, %v722
        %v724 = vsub.f32 1.0, %v723
        %v725 = vmul.f32 %v722, %v724
        %v726 = vadd.f32 %v722, %v725
        %vm727 = vweird.f32 %v630
        %vm728 = vweird.f32 %v722
        %vm729 = vmor %vm727, %vm728
        %v730 = vsel %vm729, %v722, %v726
        %v731 = vand.u32 2147483647, %v630
        %vm732 = vcmp.eq.f32.partialorder %v731, 8.507059e+37
        %v733 = vand.u32 %v630, 2147483648
        %v734 = vor.u32 1.1754944e-38, %v733
        %v735 = vsel %vm732, %v734, %v730
        %v736 = vmul.f32 1.0, %v735
        %v737 = vrcp.pop %v631
        %v738 = vmul.f32 %v631, %v737
        %v739 = vsub.f32 1.0, %v738
        %v740 = vmul.f32 %v737, %v739
        %v741 = vadd.f32 %v737, %v740
        %vm742 = vweird.f32 %v631
        %vm743 = vweird.f32 %v737
        %vm744 = vmor %vm742, %vm743
        %v745 = vsel %vm744, %v737, %v741
        %v746 = vand.u32 2147483647, %v631
        %vm747 = vcmp.eq.f32.partialorder %v746, 8.507059e+37
        %v748 = vand.u32 %v631, 2147483648
        %v749 = vor.u32 1.1754944e-38, %v748
        %v750 = vsel %vm747, %v749, %v745
        %v751 = vmul.f32 1.0, %v750
        %v752 = vmul.f32 %v592, %v646
        %v753 = vmul.f32 %v593, %v661
        %v754 = vmul.f32 %v594, %v676
        %v755 = vmul.f32 %v595, %v691
        %v756 = vmul.f32 %v596, %v706
        %v757 = vmul.f32 %v597, %v721
        %v758 = vmul.f32 %v598, %v736
        %v759 = vmul.f32 %v599, %v751
        %768 = vset.pattern.permute.xlu0 2
        %769 = vperm.xlu0 %768, %v752
        %v770 = vpop.permute.xlu0 %769
        %771 = vset.pattern.permute.xlu0 2
        %772 = vperm.xlu0 %771, %v753
        %v773 = vpop.permute.xlu0 %772
        %774 = vset.pattern.permute.xlu0 2
        %775 = vperm.xlu0 %774, %v754
        %v776 = vpop.permute.xlu0 %775
        %777 = vset.pattern.permute.xlu0 2
        %778 = vperm.xlu0 %777, %v755
        %v779 = vpop.permute.xlu0 %778
        %780 = vset.pattern.permute.xlu0 2
        %781 = vperm.xlu0 %780, %v756
        %v782 = vpop.permute.xlu0 %781
        %783 = vset.pattern.permute.xlu0 2
        %784 = vperm.xlu0 %783, %v757
        %v785 = vpop.permute.xlu0 %784
        %786 = vset.pattern.permute.xlu0 2
        %787 = vperm.xlu0 %786, %v758
        %v788 = vpop.permute.xlu0 %787
        %789 = vset.pattern.permute.xlu0 2
        %790 = vperm.xlu0 %789, %v759
        %v791 = vpop.permute.xlu0 %790
        %v792 = vperm.slane %v770, %v524
        %v793 = vperm.slane %v773, %v524
        %v794 = vperm.slane %v776, %v524
        %v795 = vperm.slane %v779, %v524
        %v796 = vperm.slane %v782, %v524
        %v797 = vperm.slane %v785, %v524
        %v798 = vperm.slane %v788, %v524
        %v799 = vperm.slane %v791, %v524
        %v800 = vsel %vm533, %v793, %v792
        %v801 = vsel %vm535, %v794, %v800
        %v802 = vsel %vm537, %v795, %v801
        %v803 = vsel %vm539, %v796, %v802
        %v804 = vsel %vm541, %v797, %v803
        %v805 = vsel %vm543, %v798, %v804
        %v806 = vsel %vm545, %v799, %v805
        %vm808 = vcmask 48128
        %v809 = vsel %vm808, %v806, 0.0
        %v811 = vrot.slane %v549, 1
        %v812 = vrot.slane %v549, 2
        %v813 = vrot.slane %v549, 3
        %v814 = vrot.slane %v549, 4
        %v815 = vrot.slane %v549, 5
        %v816 = vrot.slane %v549, 6
        %v817 = vrot.slane %v549, 7
        %v826 = vrot.slane %v809, 1
        %v827 = vrot.slane %v809, 2
        %v828 = vrot.slane %v809, 3
        %v829 = vrot.slane %v809, 4
        %v830 = vrot.slane %v809, 5
        %v831 = vrot.slane %v809, 6
        %v832 = vrot.slane %v809, 7
        %v833 = vperm.slane %v809, 0
        %v834 = vperm.slane %v826, 0
        %v835 = vperm.slane %v827, 0
        %v836 = vperm.slane %v828, 0
        %v837 = vperm.slane %v829, 0
        %v838 = vperm.slane %v830, 0
        %v839 = vperm.slane %v831, 0
        %v840 = vperm.slane %v832, 0
        %vm849 = vcmask 1040384
        %v850 = vsel %vm849, %v549, %v833
        %v851 = vsel %vm849, %v811, %v834
        %v852 = vsel %vm849, %v812, %v835
        %v853 = vsel %vm849, %v813, %v836
        %v854 = vsel %vm849, %v814, %v837
        %v855 = vsel %vm849, %v815, %v838
        %v856 = vsel %vm849, %v816, %v839
        %v857 = vsel %vm849, %v817, %v840
        %858 = vst [vmem:[%s178] sm:$0x3] %v850
        %859 = vst [vmem:[%s178 + $0x2] sm:$0x3] %v851
        %860 = vst [vmem:[%s178 + $0x4] sm:$0x3] %v852
        %861 = vst [vmem:[%s178 + $0x6] sm:$0x3] %v853
        %862 = vst [vmem:[%s178 + $0x8] sm:$0x3] %v854
        %863 = vst [vmem:[%s178 + $0xa] sm:$0x3] %v855
        %864 = vst [vmem:[%s178 + $0xc] sm:$0x3] %v856
        %865 = vst [vmem:[%s178 + $0xe] sm:$0x3] %v857
        %s866 = sand.u32 %s94, 1
        %s867 = scalar_lea.sflag [#allocation3], %s866
        %s868 = sand.u32 %s94, 1
        %s869 = smul.addr %s868, 16
        %s870 = scalar_lea.vmem [#allocation5], %s869
        // Predicated region
        $region37: #{tpu_custom_call.1} parent=31 // pred_check
          %p871 = pneg %p104
        $region38: #{tpu_custom_call.1} parent=31 // pred_check_branch
          %873 = sbr.rel (%p871) target = $region40
        $region39: #{tpu_custom_call.1} parent=31 // pred_region
          %s874 = smul.u32 8, %s18
          %876 = vsyncadd %s867, 0
          %s877 = smul.addr %s874, 2
          %s878 = scalar_lea.hbm %s3, %s877
          %s879 = sshll.u32 %s870, 4
          %s880 = int_to_ptr.vmem [resolvable:$true] %s879
          %s881 = sshll.u32 %s878, 4
          %s882 = int_to_ptr.hbm [resolvable:$true] %s881
          %887 = dma.vmem_to_hbm [thread:$0]  %s880, 256, %s882, %s867, 32, 32, 2
        $region40: #{tpu_custom_call.1} parent=31 // pred_fallthru
          _
      $region32: #{tpu_custom_call.1} parent=5 // pred_fallthru
        _
      %p888 = scmp.le.s32.totalorder 2, %s13
      // Predicated region
      $region41: #{tpu_custom_call.1} parent=5 // pred_check
        %p889 = pneg %p888
      $region42: #{tpu_custom_call.1} parent=5 // pred_check_branch
        %891 = sbr.rel (%p889) target = $region44
      $region43: #{tpu_custom_call.1} parent=5 // pred_region
        %s892 = ssub.s32 %s13, 2
        // Predicated region
        $region45: #{tpu_custom_call.1} parent=43 // pred_check
          %p893 = pneg %p110
        $region46: #{tpu_custom_call.1} parent=43 // pred_check_branch
          %895 = sbr.rel (%p893) target = $region48
        $region47: #{tpu_custom_call.1} parent=43 // pred_region
          %s896 = sand.u32 %s95, 1
          %s897 = scalar_lea.sflag [#allocation3], %s896
          %s898 = sand.u32 %s95, 1
          %s899 = smul.addr %s898, 16
          %s900 = scalar_lea.vmem [#allocation5], %s899
          %902 = dma.done %s897, 256
        $region48: #{tpu_custom_call.1} parent=43 // pred_fallthru
          _
      $region44: #{tpu_custom_call.1} parent=5 // pred_fallthru
        _
    $region6: #{tpu_custom_call.1} parent=1 // loop_footer
      %s17 = sadd.s32 1, %s13
    $region7: #{tpu_custom_call.1} parent=1 // loop_footer_branch
      %12 = sbr.rel target = $region3
    $region8: #{tpu_custom_call.1} parent=1 // loop_exit
      _
    %903 = vsyncpa [#allocation3], 1
    %s904 = scalar_lea.sflag [#allocation3], 1
    %905 = vsyncpa %s904, 1
    %906 = vsyncpa [#allocation4], 1
    %s907 = scalar_lea.sflag [#allocation4], 1
    %908 = vsyncpa %s907, 1

</llo_original>
